<compile_context>
chip_gen: v5e
topology: v5e:2x2
jax: 0.10.0
libtpu: 0.0.40
codegen_flags: <defaults>
</compile_context>

<pallas_src>
import functools

import jax
import jax.numpy as jnp
from jax.experimental import pallas as pl
from jax.experimental.pallas import tpu as pltpu

_LANE = 128        # vreg lane width (last dim)
_SUBLANE = 8       # f32 sublane count (second-to-last dim)
_MAX_BATCH_BLOCK = 256


def _round_up(n, m):
    return ((n + m - 1) // m) * m


def _fused_mlp_kernel(x_ref, w1_ref, w2_ref, o_ref, *, in_dim, hidden, num_classes):
    """log_softmax(relu(x @ W1 + b1) @ W2 + b2, dim=1) for one batch block.

    Refs (weights pre-prepared by prepare_params; x is raw/unpadded):
      x_ref : (TB, in_dim)
      w1_ref: (K1, Hp)   rows [:in_dim] = W1^T, row in_dim = b1, rest 0
      w2_ref: (Hp, Cp)   rows [:hidden] = W2^T, row hidden = b2, rest 0
      o_ref : (TB, Cp)   lane-dense store; only lanes < num_classes are meaningful
    """
    x = x_ref[...]

    # ----- Layer 1: x @ W1 + b1, ReLU -------------------------------------
    # b1 shares the W1 tile (no separate bias DMA); added on the VPU since x is
    # deliberately unpadded (no spare "ones" column to fold it through the MXU).
    w1 = w1_ref[:in_dim, :]
    b1 = w1_ref[in_dim:in_dim + 1, :]
    h = jnp.dot(x, w1, preferred_element_type=jnp.float32) + b1
    h = jnp.maximum(h, 0.0)                     # padded hidden lanes stay exactly 0

    # ----- Layer 2: bias folded through the MXU ----------------------------
    # Lane `hidden` of h is a guaranteed zero pad lane; set it to 1.0 so the
    # matching w2 row (which holds b2) does the bias add inside the matmul.
    lane_h = jax.lax.broadcasted_iota(jnp.int32, h.shape, 1)
    h = jnp.where(lane_h == hidden, 1.0, h)
    y = jnp.dot(h, w2_ref[...], preferred_element_type=jnp.float32)

    # ----- Numerically stable LogSoftmax over the valid class lanes --------
    lane_c = jax.lax.broadcasted_iota(jnp.int32, y.shape, 1)
    valid = lane_c < num_classes
    y_masked = jnp.where(valid, y, jnp.float32(-1e30))
    m = jnp.max(y_masked, axis=1, keepdims=True)
    s = y - m
    e = jnp.where(valid, jnp.exp(s), 0.0)
    lse = jnp.log(jnp.sum(e, axis=1, keepdims=True))
    o_ref[...] = (s - lse).astype(o_ref.dtype)


def prepare_params(params):
    """One-time weight prep (NOT on the per-call path): transpose to (in, out),
    zero-pad to lane-dense tiles, and pack each bias into its weight tile."""
    assert len(params) == 2, "fused kernel covers the 2-layer [in, hidden, out] Model"
    (w1, b1), (w2, b2) = params
    hidden, in_dim = w1.shape
    num_classes, hidden_w = w2.shape
    assert hidden == hidden_w

    h_pad = _round_up(hidden + 1, _LANE)   # +1 guarantees a spare lane for the b2 fold
    c_pad = _round_up(num_classes, _LANE)  # lane-dense output store
    k1 = _round_up(in_dim + 1, _SUBLANE)   # room for the b1 row

    w1_aug = jnp.zeros((k1, h_pad), jnp.float32)
    w1_aug = w1_aug.at[:in_dim, :hidden].set(w1.T)
    w1_aug = w1_aug.at[in_dim, :hidden].set(b1)

    w2_aug = jnp.zeros((h_pad, c_pad), jnp.float32)
    w2_aug = w2_aug.at[:hidden, :num_classes].set(w2.T)
    w2_aug = w2_aug.at[hidden, :num_classes].set(b2)

    meta = dict(in_dim=int(in_dim), hidden=int(hidden), num_classes=int(num_classes),
                h_pad=int(h_pad), c_pad=int(c_pad), k1=int(k1))
    return (w1_aug, w2_aug), meta


@functools.partial(
    jax.jit,
    static_argnames=("in_dim", "hidden", "num_classes", "h_pad", "c_pad", "k1"))
def fused_mlp_forward(x, w1_aug, w2_aug, *, in_dim, hidden, num_classes,
                      h_pad, c_pad, k1):
    """Per-call path: exactly one pallas_call (+ fused output slice)."""
    batch = x.shape[0]
    assert x.shape[1] == in_dim

    # Batch grid axis: single step at demo sizes, tiles over batch blocks (and
    # shards across v7x's two TensorCores via "parallel") when batch grows.
    tb = batch if batch <= _MAX_BATCH_BLOCK else _MAX_BATCH_BLOCK
    grid = (pl.cdiv(batch, tb),)

    kernel = functools.partial(_fused_mlp_kernel, in_dim=in_dim, hidden=hidden,
                               num_classes=num_classes)
    out_padded = pl.pallas_call(
        kernel,
        out_shape=jax.ShapeDtypeStruct((batch, c_pad), jnp.float32),
        grid=grid,
        in_specs=[
            pl.BlockSpec((tb, in_dim), lambda i: (i, 0)),     # x: raw, unpadded feed
            pl.BlockSpec((k1, h_pad), lambda i: (0, 0)),      # W1 (+ b1 row), resident
            pl.BlockSpec((h_pad, c_pad), lambda i: (0, 0)),   # W2 (+ b2 row), resident
        ],
        out_specs=pl.BlockSpec((tb, c_pad), lambda i: (i, 0)),
        compiler_params=pltpu.CompilerParams(dimension_semantics=("parallel",)),
    )(x, w1_aug, w2_aug)

    # Fused inside this jit; skip entirely if the consumer can read the padded buffer.
    return out_padded[:, :num_classes]


def init_params(shape, key):
    """Deterministic PyTorch-style nn.Linear init: U(-1/sqrt(in), 1/sqrt(in))."""
    params = []
    for idx in range(len(shape) - 1):
        in_dim, out_dim = shape[idx], shape[idx + 1]
        key, kw, kb = jax.random.split(key, 3)
        bound = 1.0 / jnp.sqrt(jnp.float32(in_dim))
        w = jax.random.uniform(kw, (out_dim, in_dim), jnp.float32, -bound, bound)
        b = jax.random.uniform(kb, (out_dim,), jnp.float32, -bound, bound)
        params.append((w, b))
    return params


if __name__ == "__main__":
    # Model shape: perfect-square input (LayerCoordinates sqrt convention),
    # one hidden layer, 10-class output.  shape == [64, 32, 10]
    shape = [64, 32, 10]
    batch = 8

    key = jax.random.PRNGKey(0)
    key, kx = jax.random.split(key)
    x = jax.random.normal(kx, (batch, shape[0]), jnp.float32)

    params = init_params(shape, key)
    (w1_aug, w2_aug), meta = prepare_params(params)   # one-time, off the hot path

    out = fused_mlp_forward(x, w1_aug, w2_aug, **meta)
    out = jax.block_until_ready(out)

    # Reference check against a plain JAX forward pass.
    (w1, b1), (w2, b2) = params
    h_ref = jnp.maximum(x @ w1.T + b1, 0.0)
    ref = jax.nn.log_softmax(h_ref @ w2.T + b2, axis=1)

    assert out.shape == (batch, shape[-1])
    assert bool(jnp.max(jnp.abs(out - ref)) < 1e-4)
    row_sums = jnp.exp(out).sum(axis=1)
    assert bool(jnp.all(jnp.abs(row_sums - 1.0) < 1e-4))

    print("KERNEL_OK")
</pallas_src>

<mosaic_0001>
module attributes {stable_mosaic.version = 11 : i64} {
  func.func @_fused_mlp_kernel(%arg0: i32, %arg1: memref<8x64xf32, #tpu.memory_space<vmem>>, %arg2: memref<72x128xf32, #tpu.memory_space<vmem>>, %arg3: memref<128x128xf32, #tpu.memory_space<vmem>>, %arg4: memref<8x128xf32, #tpu.memory_space<vmem>>) attributes {dimension_semantics = [#tpu.dimension_semantics<parallel>], iteration_bounds = array<i64: 1>, scalar_prefetch = 0 : i64, scratch_operands = 0 : i64, tpu.core_type = #tpu.core_type<tc>, window_params = [{transform_indices = @transform_0, window_bounds = array<i64: 8, 64>}, {pipeline_mode = #tpu.pipeline_mode<synchronous>, transform_indices = @transform_1, window_bounds = array<i64: 72, 128>}, {pipeline_mode = #tpu.pipeline_mode<synchronous>, transform_indices = @transform_2, window_bounds = array<i64: 128, 128>}, {transform_indices = @transform_3, window_bounds = array<i64: 8, 128>}]} {
    %c0 = arith.constant 0 : index
    %c0_0 = arith.constant 0 : index
    %0 = vector.load %arg1[%c0, %c0_0] : memref<8x64xf32, #tpu.memory_space<vmem>>, vector<8x64xf32>
    %c0_1 = arith.constant 0 : index
    %c0_2 = arith.constant 0 : index
    %1 = vector.load %arg2[%c0_1, %c0_2] : memref<72x128xf32, #tpu.memory_space<vmem>>, vector<64x128xf32>
    %c64 = arith.constant 64 : index
    %c0_3 = arith.constant 0 : index
    %2 = vector.load %arg2[%c64, %c0_3] : memref<72x128xf32, #tpu.memory_space<vmem>>, vector<1x128xf32>
    %cst = arith.constant dense<0.000000e+00> : vector<8x128xf32>
    %3 = tpu.matmul %0, %1, %cst {dimension_numbers = #tpu.dot_dimension_numbers<[1], [0], [0], [1], [0, 0, 1, 1], [], []>} : vector<8x64xf32>, vector<64x128xf32>, vector<8x128xf32> -> vector<8x128xf32>
    %4 = vector.broadcast %2 : vector<1x128xf32> to vector<8x128xf32>
    %5 = arith.addf %3, %4 : vector<8x128xf32>
    %cst_4 = arith.constant 0.000000e+00 : f32
    %6 = vector.broadcast %cst_4 : f32 to vector<8x128xf32>
    %7 = arith.maximumf %5, %6 : vector<8x128xf32>
    %8 = tpu.iota {dimensions = array<i32: 1>} : vector<8x128xi32>
    %c32_i32 = arith.constant 32 : i32
    %9 = vector.broadcast %c32_i32 : i32 to vector<8x128xi32>
    %10 = arith.cmpi eq, %8, %9 : vector<8x128xi32>
    %cst_5 = arith.constant 1.000000e+00 : f32
    %11 = vector.broadcast %cst_5 : f32 to vector<8x128xf32>
    %12 = arith.select %10, %11, %7 : vector<8x128xi1>, vector<8x128xf32>
    %c0_6 = arith.constant 0 : index
    %c0_7 = arith.constant 0 : index
    %13 = vector.load %arg3[%c0_6, %c0_7] : memref<128x128xf32, #tpu.memory_space<vmem>>, vector<128x128xf32>
    %cst_8 = arith.constant dense<0.000000e+00> : vector<8x128xf32>
    %14 = tpu.matmul %12, %13, %cst_8 {dimension_numbers = #tpu.dot_dimension_numbers<[1], [0], [0], [1], [0, 0, 1, 1], [], []>} : vector<8x128xf32>, vector<128x128xf32>, vector<8x128xf32> -> vector<8x128xf32>
    %15 = tpu.iota {dimensions = array<i32: 1>} : vector<8x128xi32>
    %c10_i32 = arith.constant 10 : i32
    %16 = vector.broadcast %c10_i32 : i32 to vector<8x128xi32>
    %17 = arith.cmpi slt, %15, %16 : vector<8x128xi32>
    %cst_9 = arith.constant -1.000000e+30 : f32
    %18 = vector.broadcast %cst_9 : f32 to vector<8x128xf32>
    %19 = arith.select %17, %14, %18 : vector<8x128xi1>, vector<8x128xf32>
    %cst_10 = arith.constant dense<0xFF800000> : vector<8xf32>
    %20 = vector.multi_reduction <maximumf>, %19, %cst_10 [1] : vector<8x128xf32> to vector<8xf32>
    %21 = vector.shape_cast %20 : vector<8xf32> to vector<8x1xf32>
    %22 = vector.broadcast %21 : vector<8x1xf32> to vector<8x128xf32>
    %23 = arith.subf %14, %22 : vector<8x128xf32>
    %24 = math.exp %23 : vector<8x128xf32>
    %cst_11 = arith.constant 0.000000e+00 : f32
    %25 = vector.broadcast %cst_11 : f32 to vector<8x128xf32>
    %26 = arith.select %17, %24, %25 : vector<8x128xi1>, vector<8x128xf32>
    %cst_12 = arith.constant dense<0.000000e+00> : vector<8xf32>
    %27 = vector.multi_reduction <add>, %26, %cst_12 [1] : vector<8x128xf32> to vector<8xf32>
    %28 = vector.shape_cast %27 : vector<8xf32> to vector<8x1xf32>
    %29 = math.log %28 : vector<8x1xf32>
    %30 = vector.broadcast %29 : vector<8x1xf32> to vector<8x128xf32>
    %31 = arith.subf %23, %30 : vector<8x128xf32>
    %c0_13 = arith.constant 0 : index
    %c0_14 = arith.constant 0 : index
    %32 = vector.load %arg4[%c0_13, %c0_14] : memref<8x128xf32, #tpu.memory_space<vmem>>, vector<8x128xf32>
    tpu.vector_store %arg4[%c0_13, %c0_14], %31 {strides = array<i32>} : memref<8x128xf32, #tpu.memory_space<vmem>>, vector<8x128xf32>,
    return
  }
  func.func @transform_0(%arg0: i32) -> (i32, i32) {
    %c0_i32 = arith.constant 0 : i32
    %c0_i32_0 = arith.constant 0 : i32
    return %arg0, %c0_i32 : i32, i32
  }
  func.func @transform_1(%arg0: i32) -> (i32, i32) {
    %c0_i32 = arith.constant 0 : i32
    %c0_i32_0 = arith.constant 0 : i32
    %c0_i32_1 = arith.constant 0 : i32
    return %c0_i32, %c0_i32_0 : i32, i32
  }
  func.func @transform_2(%arg0: i32) -> (i32, i32) {
    %c0_i32 = arith.constant 0 : i32
    %c0_i32_0 = arith.constant 0 : i32
    %c0_i32_1 = arith.constant 0 : i32
    return %c0_i32, %c0_i32_0 : i32, i32
  }
  func.func @transform_3(%arg0: i32) -> (i32, i32) {
    %c0_i32 = arith.constant 0 : i32
    %c0_i32_0 = arith.constant 0 : i32
    return %arg0, %c0_i32 : i32, i32
  }
}

</mosaic_0001>

<llo_original>
// kernel: fused_mlp_forward.1
$region0: #{fused_mlp_forward.1}
  #allocation0 [shape = 'u32[]', space=smem, size = 0x4, offset = 0x4, fixed_abs, tag = 'smem constant byte address 0x4 - core index']
  #allocation1 [shape = 'u32[72,128]{1,0:T(1,128)}', space=vmem, size = 0x9000, scoped, tag = 'internal scratch']
  %s0 = inlined_call_operand.hbm [shape: f32[8,64], index: 0, kind: input, shape index: {}]
  %s1 = inlined_call_operand.hbm [shape: f32[72,128], index: 1, kind: input, shape index: {}]
  %s2 = inlined_call_operand.hbm [shape: f32[128,128], index: 2, kind: input, shape index: {}]
  %s3 = inlined_call_operand.hbm [shape: f32[8,128], index: 3, kind: output, shape index: {}]
  %s4 = sld [smem:[#allocation0]]
  $region34: #{fused_mlp_forward.1} parent=0
    _
  %s6 = ssub.s32 1, %s4
  %s7 = scalar_select 0, %s6, %s4
  $region1: #{fused_mlp_forward.1} parent=0
    #allocation2 [shape = 'u8[4096]{0}', space=vmem, size = 0x1000, scoped, tag = 'input window, operand 0, single buffered']
    #allocation3 [shape = 's32[1]{0}', space=sflag, size = 0x4, scoped, tag = 'scoped memory for fused_mlp_forward.1']
    #allocation4 [shape = 's32[1]{0}', space=sflag, size = 0x4, scoped, tag = 'scoped memory for fused_mlp_forward.1']
    #allocation5 [shape = 'u8[36864]{0}', space=vmem, size = 0x9000, scoped, tag = 'input window, operand 1, single buffered']
    #allocation6 [shape = 's32[1]{0}', space=sflag, size = 0x4, scoped, tag = 'scoped memory for fused_mlp_forward.1']
    #allocation7 [shape = 'u8[65536]{0}', space=vmem, size = 0x10000, scoped, tag = 'input window, operand 2, single buffered']
    #allocation8 [shape = 'u8[4096]{0}', space=vmem, size = 0x1000, scoped, tag = 'output window, operand 0, single buffered']
    %8 = vsyncpa [#allocation3], 0
    %9 = vsyncpa [#allocation6], 0
    %10 = vsyncpa [#allocation4], 0
    // Predicated region
    $region2: #{fused_mlp_forward.1} parent=1 // pred_check
      _
    $region3: #{fused_mlp_forward.1} parent=1 // pred_check_branch
      %12 = sbr.rel (0) target = $region5
    $region4: #{fused_mlp_forward.1} parent=1 // pred_region
      %14 = vsyncadd [#allocation3], 0
      %s16 = sshll.u32 %s0, 4
      %s17 = int_to_ptr.hbm [resolvable:$true] %s16
      %s18 = sshll.u32 [#allocation2], 4
      %s19 = int_to_ptr.vmem [resolvable:$true] %s18
      %21 = dma.hbm_to_vmem [thread:$0]  %s17, 128, %s19, [#allocation3]
    $region5: #{fused_mlp_forward.1} parent=1 // pred_fallthru
      _
    // Predicated region
    $region6: #{fused_mlp_forward.1} parent=1 // pred_check
      _
    $region7: #{fused_mlp_forward.1} parent=1 // pred_check_branch
      %23 = sbr.rel (0) target = $region9
    $region8: #{fused_mlp_forward.1} parent=1 // pred_region
      %25 = vsyncadd [#allocation6], 0
      %s26 = sshll.u32 %s1, 4
      %s27 = int_to_ptr.hbm [resolvable:$true] %s26
      %s28 = sshll.u32 [#allocation5], 4
      %s29 = int_to_ptr.vmem [resolvable:$true] %s28
      %34 = dma.hbm_to_vmem [thread:$0]  %s27, 1152, %s29, [#allocation6], 128, 128, 8
    $region9: #{fused_mlp_forward.1} parent=1 // pred_fallthru
      _
    // Predicated region
    $region10: #{fused_mlp_forward.1} parent=1 // pred_check
      _
    $region11: #{fused_mlp_forward.1} parent=1 // pred_check_branch
      %36 = sbr.rel (0) target = $region13
    $region12: #{fused_mlp_forward.1} parent=1 // pred_region
      %38 = vsyncadd [#allocation6], 0
      %s39 = sshll.u32 %s2, 4
      %s40 = int_to_ptr.hbm [resolvable:$true] %s39
      %s41 = sshll.u32 [#allocation7], 4
      %s42 = int_to_ptr.vmem [resolvable:$true] %s41
      %47 = dma.hbm_to_vmem [thread:$0]  %s40, 2048, %s42, [#allocation6], 128, 128, 8
    $region13: #{fused_mlp_forward.1} parent=1 // pred_fallthru
      _
    // Predicated region
    $region14: #{fused_mlp_forward.1} parent=1 // pred_check
      _
    $region15: #{fused_mlp_forward.1} parent=1 // pred_check_branch
      %49 = sbr.rel (0) target = $region17
    $region16: #{fused_mlp_forward.1} parent=1 // pred_region
      %51 = dma.done [#allocation3], 128
    $region17: #{fused_mlp_forward.1} parent=1 // pred_fallthru
      _
    // Predicated region
    $region18: #{fused_mlp_forward.1} parent=1 // pred_check
      _
    $region19: #{fused_mlp_forward.1} parent=1 // pred_check_branch
      %53 = sbr.rel (0) target = $region21
    $region20: #{fused_mlp_forward.1} parent=1 // pred_region
      %55 = dma.done [#allocation6], 1152
    $region21: #{fused_mlp_forward.1} parent=1 // pred_fallthru
      _
    // Predicated region
    $region22: #{fused_mlp_forward.1} parent=1 // pred_check
      _
    $region23: #{fused_mlp_forward.1} parent=1 // pred_check_branch
      %57 = sbr.rel (0) target = $region25
    $region24: #{fused_mlp_forward.1} parent=1 // pred_region
      %59 = dma.done [#allocation6], 2048
    $region25: #{fused_mlp_forward.1} parent=1 // pred_fallthru
      _
    %v60 = vld [vmem:[#allocation2] sm:$0xff]
    %v61 = vld [vmem:[#allocation5] sm:$0xff]
    %v62 = vld [vmem:[#allocation5 + $0x8] sm:$0xff]
    %v63 = vld [vmem:[#allocation5 + $0x10] sm:$0xff]
    %v64 = vld [vmem:[#allocation5 + $0x18] sm:$0xff]
    %v65 = vld [vmem:[#allocation5 + $0x20] sm:$0xff]
    %v66 = vld [vmem:[#allocation5 + $0x28] sm:$0xff]
    %v67 = vld [vmem:[#allocation5 + $0x30] sm:$0xff]
    %v68 = vld [vmem:[#allocation5 + $0x38] sm:$0xff]
    %v69 = vld [vmem:[#allocation5 + $0x40] sm:$0x1]
    %v70 = vperm.slane %v69, 0
    %vm71 = vcmask 523264
    %v73 = vsel %vm71, %v60, 0
    %75 = vmatpush.msra.mxu0 0.0
    %76 = vmatpush.msra.mxu0 0.0
    %77 = vmatpush.msra.mxu0 0.0
    %78 = vmatpush.msra.mxu0 0.0
    %79 = vmatpush.msra.mxu0 0.0
    %80 = vmatpush.msra.mxu0 0.0
    %81 = vmatpush.msra.mxu0 0.0
    %82 = vmatpush.msra.mxu0 0.0
    %83 = vmatpush.msra.mxu0 %v68
    %84 = vmatpush.msra.mxu0 %v67
    %85 = vmatpush.msra.mxu0 %v66
    %86 = vmatpush.msra.mxu0 %v65
    %87 = vmatpush.msra.mxu0 %v64
    %88 = vmatpush.msra.mxu0 %v63
    %89 = vmatpush.msra.mxu0 %v62
    %90 = vmatpush.msra.mxu0 %v61
    %91 = vmatmul.f32.gmra.mxu0 %v73
    %v92 = vpop.f32.mrf.mxu0
    %v93 = vadd.f32 %v70, %v92
    %94 = vdwg.mxu0
    %v95 = vmax.f32 %v93, 0.0
    %v96 = vlaneseq
    %v97 = vand.u32 %v96, 127
    %vm98 = vcmp.eq.s32.totalorder %v97, 32
    %v99 = vsel %vm98, 1.0, %v95
    %v100 = vld [vmem:[#allocation7] sm:$0xff]
    %v101 = vld [vmem:[#allocation7 + $0x8] sm:$0xff]
    %v102 = vld [vmem:[#allocation7 + $0x10] sm:$0xff]
    %v103 = vld [vmem:[#allocation7 + $0x18] sm:$0xff]
    %v104 = vld [vmem:[#allocation7 + $0x20] sm:$0xff]
    %v105 = vld [vmem:[#allocation7 + $0x28] sm:$0xff]
    %v106 = vld [vmem:[#allocation7 + $0x30] sm:$0xff]
    %v107 = vld [vmem:[#allocation7 + $0x38] sm:$0xff]
    %v108 = vld [vmem:[#allocation7 + $0x40] sm:$0xff]
    %v109 = vld [vmem:[#allocation7 + $0x48] sm:$0xff]
    %v110 = vld [vmem:[#allocation7 + $0x50] sm:$0xff]
    %v111 = vld [vmem:[#allocation7 + $0x58] sm:$0xff]
    %v112 = vld [vmem:[#allocation7 + $0x60] sm:$0xff]
    %v113 = vld [vmem:[#allocation7 + $0x68] sm:$0xff]
    %v114 = vld [vmem:[#allocation7 + $0x70] sm:$0xff]
    %v115 = vld [vmem:[#allocation7 + $0x78] sm:$0xff]
    %116 = vmatpush.msra.mxu0 %v115
    %117 = vmatpush.msra.mxu0 %v114
    %118 = vmatpush.msra.mxu0 %v113
    %119 = vmatpush.msra.mxu0 %v112
    %120 = vmatpush.msra.mxu0 %v111
    %121 = vmatpush.msra.mxu0 %v110
    %122 = vmatpush.msra.mxu0 %v109
    %123 = vmatpush.msra.mxu0 %v108
    %124 = vmatpush.msra.mxu0 %v107
    %125 = vmatpush.msra.mxu0 %v106
    %126 = vmatpush.msra.mxu0 %v105
    %127 = vmatpush.msra.mxu0 %v104
    %128 = vmatpush.msra.mxu0 %v103
    %129 = vmatpush.msra.mxu0 %v102
    %130 = vmatpush.msra.mxu0 %v101
    %131 = vmatpush.msra.mxu0 %v100
    %132 = vmatmul.f32.gmra.mxu0 %v99
    %v133 = vpop.f32.mrf.mxu0
    %v134 = vadd.f32 0.0, %v133
    %135 = vdwg.mxu0
    %vm136 = vcmp.lt.s32.totalorder %v97, 10
    %v137 = vsel %vm136, %v134, -1e+30
    %138 = vmax.xlane.f32.xlu0 %v137
    %v139 = vpop.xlane.xlu0 %138
    %v140 = vsub.f32 %v134, %v139
    %v141 = vmul.f32 %v140, 1.442695
    %v142 = vpow.pop %v141
    %v143 = vsel %vm136, %v142, 0.0
    %144 = vadd.xlane.f32.xlu0 %v143
    %v145 = vpop.xlane.xlu0 %144
    %v146 = vlog2.pop %v145
    %v147 = vmul.f32 %v146, 0.6931472
    %v148 = vsub.f32 %v140, %v147
    %149 = vst [vmem:[#allocation8] sm:$0xff] %v148
    // Predicated region
    $region26: #{fused_mlp_forward.1} parent=1 // pred_check
      _
    $region27: #{fused_mlp_forward.1} parent=1 // pred_check_branch
      %151 = sbr.rel (0) target = $region29
    $region28: #{fused_mlp_forward.1} parent=1 // pred_region
      %153 = vsyncadd [#allocation4], 0
      %s155 = sshll.u32 [#allocation8], 4
      %s156 = int_to_ptr.vmem [resolvable:$true] %s155
      %s157 = sshll.u32 %s3, 4
      %s158 = int_to_ptr.hbm [resolvable:$true] %s157
      %160 = dma.vmem_to_hbm [thread:$0]  %s156, 128, %s158, [#allocation4]
    $region29: #{fused_mlp_forward.1} parent=1 // pred_fallthru
      _
    // Predicated region
    $region30: #{fused_mlp_forward.1} parent=1 // pred_check
      _
    $region31: #{fused_mlp_forward.1} parent=1 // pred_check_branch
      %162 = sbr.rel (0) target = $region33
    $region32: #{fused_mlp_forward.1} parent=1 // pred_region
      %164 = dma.done [#allocation4], 128
    $region33: #{fused_mlp_forward.1} parent=1 // pred_fallthru
      _
    %165 = vsyncpa [#allocation3], 1
    %166 = vsyncpa [#allocation6], 1
    %167 = vsyncpa [#allocation4], 1

</llo_original>
